<compile_context>
chip_gen: v7x
topology: tpu7x:2x2x1
jax: 0.10.0
libtpu: 0.0.40
codegen_flags: <defaults>
</compile_context>

<pallas_src>
import functools

import jax
import jax.numpy as jnp
from jax.experimental import pallas as pl
from jax.experimental.pallas import tpu as pltpu


def _round_up(x, m):
    return (x + m - 1) // m * m


def _choose_batch_tile(B):
    """Batch tile: multiple of 16 (bf16 sublanes), <= 512, >= 2 grid steps when possible."""
    if B <= 16:
        return 16
    return min(512, _round_up(pl.cdiv(B, 2), 16))


def actor_critic_kernel(x_ref, w1_ref, b1_ref, w2_ref, b2_ref, wh_ref, bh_ref,
                        probs_ref, value_ref, *, action_space):
    x = x_ref[...]                                              # [TB, S] bf16 (unpadded feats)

    # linear1 + ReLU  (bf16 MXU inputs, f32 accumulation)
    h1 = jnp.dot(x, w1_ref[...], preferred_element_type=jnp.float32) + b1_ref[...]
    h1 = jnp.maximum(h1, 0.0)                                   # [TB, 128] f32

    # linear2 + ReLU
    h2 = jnp.dot(h1.astype(jnp.bfloat16), w2_ref[...],
                 preferred_element_type=jnp.float32) + b2_ref[...]
    h2 = jnp.maximum(h2, 0.0)                                   # [TB, 256] f32

    # Fused actor+critic head: single lane-padded matmul.
    #   cols [0, A)  -> actor logits
    #   col  A       -> critic value
    #   cols (A,128) -> zero padding
    heads = jnp.dot(h2.astype(jnp.bfloat16), wh_ref[...],
                    preferred_element_type=jnp.float32) + bh_ref[...]   # [TB, 128] f32

    col = jax.lax.broadcasted_iota(jnp.int32, heads.shape, 1)
    # Mask value + padded columns out of the softmax (exp -> exactly 0).
    logits = jnp.where(col < action_space, heads, -1e30)
    m = jnp.max(logits, axis=-1, keepdims=True)
    e = jnp.exp(logits - m)
    denom = jnp.sum(e, axis=-1, keepdims=True)
    probs = e / denom                                           # exact divide -> sums to 1

    probs_ref[...] = probs.astype(probs_ref.dtype)              # lane-dense bf16 slab
    value_ref[...] = heads[:, action_space:action_space + 1]    # f32 critic value column


def pack_params(params, state_space, action_space):
    """Host-side packing: cast/fuse/transpose once, reuse across calls."""
    hp = max(128, _round_up(action_space + 1, 128))

    w1 = params["w1"].astype(jnp.bfloat16)                      # [S, 128], no feature padding
    b1 = params["b1"].reshape(1, 128).astype(jnp.float32)
    w2 = params["w2"].astype(jnp.bfloat16)                      # [128, 256]
    b2 = params["b2"].reshape(1, 256).astype(jnp.float32)

    # Fused head weight/bias: [256, hp], cols 0..A-1 = actor, col A = critic.
    wh = jnp.zeros((256, hp), jnp.bfloat16)
    wh = wh.at[:, :action_space].set(params["wa"].astype(jnp.bfloat16))
    wh = wh.at[:, action_space:action_space + 1].set(params["wc"].astype(jnp.bfloat16))
    bh = jnp.zeros((1, hp), jnp.float32)
    bh = bh.at[:, :action_space].set(params["ba"].reshape(1, -1))
    bh = bh.at[:, action_space:action_space + 1].set(params["bc"].reshape(1, -1))

    return {"w1": w1, "b1": b1, "w2": w2, "b2": b2, "wh": wh, "bh": bh,
            "action_space": action_space, "state_space": state_space}


def actor_critic_forward(state, packed):
    """state: [B, state_space] f32. Returns (value_est [B,1], action_prob [B,A])."""
    A = packed["action_space"]
    hp = packed["wh"].shape[1]
    B, S = state.shape

    TB = _choose_batch_tile(B)
    b_pad = _round_up(B, TB)

    # bf16 activations straight from HBM; pad only the batch dim (cheap, fuses under jit).
    x = state.astype(jnp.bfloat16)
    if b_pad != B:
        x = jnp.pad(x, ((0, b_pad - B), (0, 0)))

    flops = 2 * b_pad * (S * 128 + 128 * 256 + 256 * hp)
    bytes_accessed = (x.size * 2
                      + (packed["w1"].size + packed["w2"].size + packed["wh"].size) * 2
                      + (packed["b1"].size + packed["b2"].size + packed["bh"].size) * 4
                      + b_pad * hp * 2 + b_pad * 4)

    kernel = functools.partial(actor_critic_kernel, action_space=A)
    probs_slab, value = pl.pallas_call(
        kernel,
        out_shape=(jax.ShapeDtypeStruct((b_pad, hp), jnp.bfloat16),
                   jax.ShapeDtypeStruct((b_pad, 1), jnp.float32)),
        grid=(b_pad // TB,),
        in_specs=[
            pl.BlockSpec((TB, S), lambda i: (i, 0)),      # activations: tiled over batch
            pl.BlockSpec((S, 128), lambda i: (0, 0)),     # weights/biases: VMEM-resident
            pl.BlockSpec((1, 128), lambda i: (0, 0)),
            pl.BlockSpec((128, 256), lambda i: (0, 0)),
            pl.BlockSpec((1, 256), lambda i: (0, 0)),
            pl.BlockSpec((256, hp), lambda i: (0, 0)),
            pl.BlockSpec((1, hp), lambda i: (0, 0)),
        ],
        out_specs=(pl.BlockSpec((TB, hp), lambda i: (i, 0)),   # lane-dense bf16 prob slab
                   pl.BlockSpec((TB, 1), lambda i: (i, 0))),   # tiny f32 value column
        compiler_params=pltpu.CompilerParams(
            dimension_semantics=("parallel",),                 # megacore shard on v7x
            vmem_limit_bytes=32 * 1024 * 1024,
        ),
        cost_estimate=pl.CostEstimate(flops=flops,
                                      transcendentals=b_pad * hp,
                                      bytes_accessed=bytes_accessed),
    )(x, packed["w1"], packed["b1"], packed["w2"], packed["b2"],
      packed["wh"], packed["bh"])

    value_est = value[:B]
    action_prob = probs_slab[:B, :A].astype(jnp.float32)
    return value_est, action_prob


def init_params(key, state_space, action_space):
    """Deterministic synthetic init. Weights stored as [in, out], biases as [out]."""
    ks = jax.random.split(key, 8)

    def w(k, fan_in, fan_out):
        bound = 1.0 / jnp.sqrt(fan_in)
        return jax.random.uniform(k, (fan_in, fan_out), jnp.float32, -bound, bound)

    def b(k, fan_in, fan_out):
        bound = 1.0 / jnp.sqrt(fan_in)
        return jax.random.uniform(k, (fan_out,), jnp.float32, -bound, bound)

    return {
        "w1": w(ks[0], state_space, 128), "b1": b(ks[1], state_space, 128),
        "w2": w(ks[2], 128, 256),         "b2": b(ks[3], 128, 256),
        "wa": w(ks[4], 256, action_space), "ba": b(ks[5], 256, action_space),
        "wc": w(ks[6], 256, 1),           "bc": b(ks[7], 256, 1),
    }


def reference_forward(state, params):
    """Pure-JAX reference mirroring the kernel's bf16-weight/activation, f32-accumulate numerics."""
    xb = state.astype(jnp.bfloat16)
    w1 = params["w1"].astype(jnp.bfloat16)
    w2 = params["w2"].astype(jnp.bfloat16)
    wa = params["wa"].astype(jnp.bfloat16)
    wc = params["wc"].astype(jnp.bfloat16)
    h1 = jnp.maximum(jnp.dot(xb, w1, preferred_element_type=jnp.float32) + params["b1"], 0.0)
    h2 = jnp.maximum(jnp.dot(h1.astype(jnp.bfloat16), w2,
                             preferred_element_type=jnp.float32) + params["b2"], 0.0)
    logits = jnp.dot(h2.astype(jnp.bfloat16), wa,
                     preferred_element_type=jnp.float32) + params["ba"]
    probs = jax.nn.softmax(logits, axis=-1)
    value = jnp.dot(h2.astype(jnp.bfloat16), wc,
                    preferred_element_type=jnp.float32) + params["bc"]
    return value, probs


# TODO(synk): select_action (Categorical sampling) and compute_returns/Adam step are
# host-side RL bookkeeping in the PyTorch module, not part of the forward-pass kernel.

if __name__ == "__main__":
    key = jax.random.PRNGKey(0)
    k_param, k_state = jax.random.split(key)

    state_space = 16
    action_space = 4
    batch = 8

    params = init_params(k_param, state_space, action_space)
    packed = pack_params(params, state_space, action_space)
    state = jax.random.normal(k_state, (batch, state_space), jnp.float32)

    # jit so the wrapper pad/cast/slice ops fuse around the pallas_call.
    fwd = jax.jit(lambda s: actor_critic_forward(s, packed))
    value_est, action_prob = fwd(state)
    jax.block_until_ready((value_est, action_prob))

    value_ref, probs_ref = reference_forward(state, params)

    assert value_est.shape == (batch, 1) and action_prob.shape == (batch, action_space)
    # Tolerances cover MXU vs XLA accumulation order and bf16 output rounding of probs.
    assert jnp.allclose(value_est, value_ref, atol=5e-3, rtol=1e-3), "value mismatch"
    assert jnp.allclose(action_prob, probs_ref, atol=5e-3, rtol=2e-2), "probs mismatch"
    # Exact in-kernel divide; residual error is only the bf16 output quantization (~A*2^-9).
    assert jnp.allclose(jnp.sum(action_prob, axis=-1), 1.0, atol=5e-3), "probs not normalized"

    print("KERNEL_OK")
</pallas_src>

<mosaic_0001>
module attributes {stable_mosaic.version = 11 : i64} {
  func.func @actor_critic_kernel(%arg0: i32, %arg1: memref<16x16xbf16, #tpu.memory_space<vmem>>, %arg2: memref<16x128xbf16, #tpu.memory_space<vmem>>, %arg3: memref<1x128xf32, #tpu.memory_space<vmem>>, %arg4: memref<128x256xbf16, #tpu.memory_space<vmem>>, %arg5: memref<1x256xf32, #tpu.memory_space<vmem>>, %arg6: memref<256x128xbf16, #tpu.memory_space<vmem>>, %arg7: memref<1x128xf32, #tpu.memory_space<vmem>>, %arg8: memref<16x128xbf16, #tpu.memory_space<vmem>>, %arg9: memref<16x1xf32, #tpu.memory_space<vmem>>) attributes {dimension_semantics = [#tpu.dimension_semantics<parallel>], iteration_bounds = array<i64: 1>, scalar_prefetch = 0 : i64, scratch_operands = 0 : i64, tpu.core_type = #tpu.core_type<tc>, window_params = [{transform_indices = @transform_0, window_bounds = array<i64: 16, 16>}, {pipeline_mode = #tpu.pipeline_mode<synchronous>, transform_indices = @transform_1, window_bounds = array<i64: 16, 128>}, {pipeline_mode = #tpu.pipeline_mode<synchronous>, transform_indices = @transform_2, window_bounds = array<i64: 1, 128>}, {pipeline_mode = #tpu.pipeline_mode<synchronous>, transform_indices = @transform_3, window_bounds = array<i64: 128, 256>}, {pipeline_mode = #tpu.pipeline_mode<synchronous>, transform_indices = @transform_4, window_bounds = array<i64: 1, 256>}, {pipeline_mode = #tpu.pipeline_mode<synchronous>, transform_indices = @transform_5, window_bounds = array<i64: 256, 128>}, {pipeline_mode = #tpu.pipeline_mode<synchronous>, transform_indices = @transform_6, window_bounds = array<i64: 1, 128>}, {transform_indices = @transform_7, window_bounds = array<i64: 16, 128>}, {transform_indices = @transform_8, window_bounds = array<i64: 16, 1>}]} {
    %c0 = arith.constant 0 : index
    %c0_0 = arith.constant 0 : index
    %0 = vector.load %arg1[%c0, %c0_0] : memref<16x16xbf16, #tpu.memory_space<vmem>>, vector<16x16xbf16>
    %c0_1 = arith.constant 0 : index
    %c0_2 = arith.constant 0 : index
    %1 = vector.load %arg2[%c0_1, %c0_2] : memref<16x128xbf16, #tpu.memory_space<vmem>>, vector<16x128xbf16>
    %cst = arith.constant dense<0.000000e+00> : vector<16x128xf32>
    %2 = tpu.matmul %0, %1, %cst {dimension_numbers = #tpu.dot_dimension_numbers<[1], [0], [0], [1], [0, 0, 1, 1], [], []>} : vector<16x16xbf16>, vector<16x128xbf16>, vector<16x128xf32> -> vector<16x128xf32>
    %c0_3 = arith.constant 0 : index
    %c0_4 = arith.constant 0 : index
    %3 = vector.load %arg3[%c0_3, %c0_4] : memref<1x128xf32, #tpu.memory_space<vmem>>, vector<1x128xf32>
    %4 = vector.broadcast %3 : vector<1x128xf32> to vector<16x128xf32>
    %5 = arith.addf %2, %4 : vector<16x128xf32>
    %cst_5 = arith.constant 0.000000e+00 : f32
    %6 = vector.broadcast %cst_5 : f32 to vector<16x128xf32>
    %7 = arith.maximumf %5, %6 : vector<16x128xf32>
    %8 = arith.truncf %7 : vector<16x128xf32> to vector<16x128xbf16>
    %c0_6 = arith.constant 0 : index
    %c0_7 = arith.constant 0 : index
    %9 = vector.load %arg4[%c0_6, %c0_7] : memref<128x256xbf16, #tpu.memory_space<vmem>>, vector<128x256xbf16>
    %cst_8 = arith.constant dense<0.000000e+00> : vector<16x256xf32>
    %10 = tpu.matmul %8, %9, %cst_8 {dimension_numbers = #tpu.dot_dimension_numbers<[1], [0], [0], [1], [0, 0, 1, 1], [], []>} : vector<16x128xbf16>, vector<128x256xbf16>, vector<16x256xf32> -> vector<16x256xf32>
    %c0_9 = arith.constant 0 : index
    %c0_10 = arith.constant 0 : index
    %11 = vector.load %arg5[%c0_9, %c0_10] : memref<1x256xf32, #tpu.memory_space<vmem>>, vector<1x256xf32>
    %12 = vector.broadcast %11 : vector<1x256xf32> to vector<16x256xf32>
    %13 = arith.addf %10, %12 : vector<16x256xf32>
    %cst_11 = arith.constant 0.000000e+00 : f32
    %14 = vector.broadcast %cst_11 : f32 to vector<16x256xf32>
    %15 = arith.maximumf %13, %14 : vector<16x256xf32>
    %16 = arith.truncf %15 : vector<16x256xf32> to vector<16x256xbf16>
    %c0_12 = arith.constant 0 : index
    %c0_13 = arith.constant 0 : index
    %17 = vector.load %arg6[%c0_12, %c0_13] : memref<256x128xbf16, #tpu.memory_space<vmem>>, vector<256x128xbf16>
    %cst_14 = arith.constant dense<0.000000e+00> : vector<16x128xf32>
    %18 = tpu.matmul %16, %17, %cst_14 {dimension_numbers = #tpu.dot_dimension_numbers<[1], [0], [0], [1], [0, 0, 1, 1], [], []>} : vector<16x256xbf16>, vector<256x128xbf16>, vector<16x128xf32> -> vector<16x128xf32>
    %c0_15 = arith.constant 0 : index
    %c0_16 = arith.constant 0 : index
    %19 = vector.load %arg7[%c0_15, %c0_16] : memref<1x128xf32, #tpu.memory_space<vmem>>, vector<1x128xf32>
    %20 = vector.broadcast %19 : vector<1x128xf32> to vector<16x128xf32>
    %21 = arith.addf %18, %20 : vector<16x128xf32>
    %22 = tpu.iota {dimensions = array<i32: 1>} : vector<16x128xi32>
    %c4_i32 = arith.constant 4 : i32
    %23 = vector.broadcast %c4_i32 : i32 to vector<16x128xi32>
    %24 = arith.cmpi slt, %22, %23 : vector<16x128xi32>
    %cst_17 = arith.constant -1.000000e+30 : f32
    %25 = vector.broadcast %cst_17 : f32 to vector<16x128xf32>
    %26 = arith.select %24, %21, %25 : vector<16x128xi1>, vector<16x128xf32>
    %cst_18 = arith.constant dense<0xFF800000> : vector<16xf32>
    %27 = vector.multi_reduction <maximumf>, %26, %cst_18 [1] : vector<16x128xf32> to vector<16xf32>
    %28 = vector.shape_cast %27 : vector<16xf32> to vector<16x1xf32>
    %29 = vector.broadcast %28 : vector<16x1xf32> to vector<16x128xf32>
    %30 = arith.subf %26, %29 : vector<16x128xf32>
    %31 = math.exp %30 : vector<16x128xf32>
    %cst_19 = arith.constant dense<0.000000e+00> : vector<16xf32>
    %32 = vector.multi_reduction <add>, %31, %cst_19 [1] : vector<16x128xf32> to vector<16xf32>
    %33 = vector.shape_cast %32 : vector<16xf32> to vector<16x1xf32>
    %34 = vector.broadcast %33 : vector<16x1xf32> to vector<16x128xf32>
    %35 = arith.divf %31, %34 : vector<16x128xf32>
    %36 = arith.truncf %35 : vector<16x128xf32> to vector<16x128xbf16>
    %c0_20 = arith.constant 0 : index
    %c0_21 = arith.constant 0 : index
    %37 = vector.load %arg8[%c0_20, %c0_21] : memref<16x128xbf16, #tpu.memory_space<vmem>>, vector<16x128xbf16>
    tpu.vector_store %arg8[%c0_20, %c0_21], %36 {strides = array<i32>} : memref<16x128xbf16, #tpu.memory_space<vmem>>, vector<16x128xbf16>,
    %38 = vector.extract_strided_slice %21 {offsets = [0, 4], sizes = [16, 1], strides = [1, 1]} : vector<16x128xf32> to vector<16x1xf32>
    %c0_22 = arith.constant 0 : index
    %c0_23 = arith.constant 0 : index
    %39 = vector.load %arg9[%c0_22, %c0_23] : memref<16x1xf32, #tpu.memory_space<vmem>>, vector<16x1xf32>
    tpu.vector_store %arg9[%c0_22, %c0_23], %38 {strides = array<i32>} : memref<16x1xf32, #tpu.memory_space<vmem>>, vector<16x1xf32>,
    return
  }
  func.func @transform_0(%arg0: i32) -> (i32, i32) {
    %c0_i32 = arith.constant 0 : i32
    %c0_i32_0 = arith.constant 0 : i32
    return %arg0, %c0_i32 : i32, i32
  }
  func.func @transform_1(%arg0: i32) -> (i32, i32) {
    %c0_i32 = arith.constant 0 : i32
    %c0_i32_0 = arith.constant 0 : i32
    %c0_i32_1 = arith.constant 0 : i32
    return %c0_i32, %c0_i32_0 : i32, i32
  }
  func.func @transform_2(%arg0: i32) -> (i32, i32) {
    %c0_i32 = arith.constant 0 : i32
    %c0_i32_0 = arith.constant 0 : i32
    %c0_i32_1 = arith.constant 0 : i32
    return %c0_i32, %c0_i32_0 : i32, i32
  }
  func.func @transform_3(%arg0: i32) -> (i32, i32) {
    %c0_i32 = arith.constant 0 : i32
    %c0_i32_0 = arith.constant 0 : i32
    %c0_i32_1 = arith.constant 0 : i32
    return %c0_i32, %c0_i32_0 : i32, i32
  }
  func.func @transform_4(%arg0: i32) -> (i32, i32) {
    %c0_i32 = arith.constant 0 : i32
    %c0_i32_0 = arith.constant 0 : i32
    %c0_i32_1 = arith.constant 0 : i32
    return %c0_i32, %c0_i32_0 : i32, i32
  }
  func.func @transform_5(%arg0: i32) -> (i32, i32) {
    %c0_i32 = arith.constant 0 : i32
    %c0_i32_0 = arith.constant 0 : i32
    %c0_i32_1 = arith.constant 0 : i32
    return %c0_i32, %c0_i32_0 : i32, i32
  }
  func.func @transform_6(%arg0: i32) -> (i32, i32) {
    %c0_i32 = arith.constant 0 : i32
    %c0_i32_0 = arith.constant 0 : i32
    %c0_i32_1 = arith.constant 0 : i32
    return %c0_i32, %c0_i32_0 : i32, i32
  }
  func.func @transform_7(%arg0: i32) -> (i32, i32) {
    %c0_i32 = arith.constant 0 : i32
    %c0_i32_0 = arith.constant 0 : i32
    return %arg0, %c0_i32 : i32, i32
  }
  func.func @transform_8(%arg0: i32) -> (i32, i32) {
    %c0_i32 = arith.constant 0 : i32
    %c0_i32_0 = arith.constant 0 : i32
    return %arg0, %c0_i32 : i32, i32
  }
}

</mosaic_0001>

<llo_original>
// kernel: _lambda_.1
$region0: #{_lambda_.1}
  #allocation0 [shape = 'u32[]', space=smem, size = 0x4, offset = 0x4, fixed_abs, tag = 'smem constant byte address 0x4 - core index']
  #allocation1 [shape = 'u32[144,128]{1,0:T(1,128)}', space=vmem, size = 0x12000, scoped, tag = 'internal scratch']
  %s0 = inlined_call_operand.vmem [shape: bf16[16,16], index: 0, kind: input, shape index: {}]
  %s1 = inlined_call_operand.vmem [shape: bf16[16,128], index: 1, kind: input, shape index: {}]
  %s2 = inlined_call_operand.vmem [shape: f32[1,128], index: 2, kind: input, shape index: {}]
  %s3 = inlined_call_operand.vmem [shape: bf16[128,256], index: 3, kind: input, shape index: {}]
  %s4 = inlined_call_operand.vmem [shape: f32[1,256], index: 4, kind: input, shape index: {}]
  %s5 = inlined_call_operand.vmem [shape: bf16[256,128], index: 5, kind: input, shape index: {}]
  %s6 = inlined_call_operand.vmem [shape: f32[1,128], index: 6, kind: input, shape index: {}]
  %s7 = inlined_call_operand.vmem [shape: bf16[16,128], index: 7, kind: output, shape index: {0}]
  %s8 = inlined_call_operand.vmem [shape: f32[16,1], index: 8, kind: output, shape index: {1}]
  %9 = xla_tuple %s7, %s8
  %s10 = sld [smem:[#allocation0]]
  $region46: #{_lambda_.1} parent=0
    _
  %s12 = ssub.s32 1, %s10
  %s13 = scalar_select 0, %s12, %s10
  // Predicated region
  $region2: #{_lambda_.1} parent=0 // pred_check
    _
  $region3: #{_lambda_.1} parent=0 // pred_check_branch
    %15 = sbr.rel (0) target = $region5
  $region4: #{_lambda_.1} parent=0 // pred_region
    _
  $region5: #{_lambda_.1} parent=0 // pred_fallthru
    _
  // Predicated region
  $region6: #{_lambda_.1} parent=0 // pred_check
    _
  $region7: #{_lambda_.1} parent=0 // pred_check_branch
    %17 = sbr.rel (0) target = $region9
  $region8: #{_lambda_.1} parent=0 // pred_region
    _
  $region9: #{_lambda_.1} parent=0 // pred_fallthru
    _
  // Predicated region
  $region10: #{_lambda_.1} parent=0 // pred_check
    _
  $region11: #{_lambda_.1} parent=0 // pred_check_branch
    %19 = sbr.rel (0) target = $region13
  $region12: #{_lambda_.1} parent=0 // pred_region
    _
  $region13: #{_lambda_.1} parent=0 // pred_fallthru
    _
  // Predicated region
  $region14: #{_lambda_.1} parent=0 // pred_check
    _
  $region15: #{_lambda_.1} parent=0 // pred_check_branch
    %21 = sbr.rel (0) target = $region17
  $region16: #{_lambda_.1} parent=0 // pred_region
    _
  $region17: #{_lambda_.1} parent=0 // pred_fallthru
    _
  // Predicated region
  $region18: #{_lambda_.1} parent=0 // pred_check
    _
  $region19: #{_lambda_.1} parent=0 // pred_check_branch
    %23 = sbr.rel (0) target = $region21
  $region20: #{_lambda_.1} parent=0 // pred_region
    _
  $region21: #{_lambda_.1} parent=0 // pred_fallthru
    _
  // Predicated region
  $region22: #{_lambda_.1} parent=0 // pred_check
    _
  $region23: #{_lambda_.1} parent=0 // pred_check_branch
    %25 = sbr.rel (0) target = $region25
  $region24: #{_lambda_.1} parent=0 // pred_region
    _
  $region25: #{_lambda_.1} parent=0 // pred_fallthru
    _
  // Predicated region
  $region26: #{_lambda_.1} parent=0 // pred_check
    _
  $region27: #{_lambda_.1} parent=0 // pred_check_branch
    %27 = sbr.rel (0) target = $region29
  $region28: #{_lambda_.1} parent=0 // pred_region
    _
  $region29: #{_lambda_.1} parent=0 // pred_fallthru
    _
  %v29 = vld [vmem:[%s0] sm:$0xf]
  %v30 = vld [vmem:[%s0 + $0x4] sm:$0xf]
  %v31 = vld [vmem:[%s1] sm:$0xf]
  %v32 = vld [vmem:[%s1 + $0x4] sm:$0xf]
  %v33 = vld [vmem:[%s2] sm:$0x1]
  %v35 = vlaneseq
  %v36 = vshrl.u32 %v35, 7
  %v37 = vsub.s32 0, %v36
  %v38 = vrot.slane %v33, %v37
  %v42 = vunpack.c.l.b16 %v29
  %v43 = vunpack.c.l.b16 %v30
  %v44 = vpack.c.b16 %v43, %v42
  %v47 = vunpack.c.l.b16 %v31
  %v48 = vunpack.c.l.b16 %v32
  %v49 = vpack.c.b16 %v48, %v47
  %vm51 = vcmask 130048
  %v53 = vsel %vm51, %v44, 0
  %55 = vmatprep.subr.bf16.mxu0 0
  %56 = vmatpush1.bf16.msra.mxu0 %v49
  %57 = vmatprep.subr.bf16.mxu0 0
  %58 = vmatpush1.bf16.msra.mxu0 0
  %59 = vmatprep.subr.bf16.mxu0 0
  %60 = vmatpush1.bf16.msra.mxu0 0
  %61 = vmatprep.subr.bf16.mxu0 0
  %62 = vmatpush1.bf16.msra.mxu0 0
  %63 = vmatprep.subr.bf16.mxu0 0
  %64 = vmatpush1.bf16.msra.mxu0 0
  %65 = vmatprep.subr.bf16.mxu0 0
  %66 = vmatpush1.bf16.msra.mxu0 0
  %67 = vmatprep.subr.bf16.mxu0 0
  %68 = vmatpush1.bf16.msra.mxu0 0
  %69 = vmatprep.subr.bf16.mxu0 0
  %70 = vmatpush1.bf16.msra.mxu0 0
  %71 = vmatprep.subr.bf16.mxu0 0
  %72 = vmatpush1.bf16.msra.mxu0 0
  %73 = vmatprep.subr.bf16.mxu0 0
  %74 = vmatpush1.bf16.msra.mxu0 0
  %75 = vmatprep.subr.bf16.mxu0 0
  %76 = vmatpush1.bf16.msra.mxu0 0
  %77 = vmatprep.subr.bf16.mxu0 0
  %78 = vmatpush1.bf16.msra.mxu0 0
  %79 = vmatprep.subr.bf16.mxu0 0
  %80 = vmatpush1.bf16.msra.mxu0 0
  %81 = vmatprep.subr.bf16.mxu0 0
  %82 = vmatpush1.bf16.msra.mxu0 0
  %83 = vmatprep.subr.bf16.mxu0 0
  %84 = vmatpush1.bf16.msra.mxu0 0
  %85 = vmatprep.subr.bf16.mxu0 0
  %86 = vmatpush1.bf16.msra.mxu0 0
  %87 = vmatprep.mubr.bf16.mxu0 0
  %88 = vmatmul.mubr.bf16.gmra.mrb[0].mxu0 %v53
  %v89 = vpop.f32.mrb[0].mxu0
  %v90 = vadd.f32 %v38, %v89
  %v91 = vpop.f32.mrb[0].mxu0
  %v92 = vpop.f32.mrb[0].mxu0
  %v93 = vadd.f32 %v38, %v92
  %v94 = vpop.f32.mrb[0].mxu0
  %95 = vdwg.mxu0
  %v96 = vmax.f32 %v90, 0.0
  %v97 = vmax.f32 %v93, 0.0
  %v98 = vpack.c.bf16 %v97, %v96
  %v99 = vld [vmem:[%s3] sm:$0xff]
  %v100 = vld [vmem:[%s3 + $0x8] sm:$0xff]
  %v101 = vld [vmem:[%s3 + $0x10] sm:$0xff]
  %v102 = vld [vmem:[%s3 + $0x18] sm:$0xff]
  %v103 = vld [vmem:[%s3 + $0x20] sm:$0xff]
  %v104 = vld [vmem:[%s3 + $0x28] sm:$0xff]
  %v105 = vld [vmem:[%s3 + $0x30] sm:$0xff]
  %v106 = vld [vmem:[%s3 + $0x38] sm:$0xff]
  %v107 = vld [vmem:[%s3 + $0x40] sm:$0xff]
  %v108 = vld [vmem:[%s3 + $0x48] sm:$0xff]
  %v109 = vld [vmem:[%s3 + $0x50] sm:$0xff]
  %v110 = vld [vmem:[%s3 + $0x58] sm:$0xff]
  %v111 = vld [vmem:[%s3 + $0x60] sm:$0xff]
  %v112 = vld [vmem:[%s3 + $0x68] sm:$0xff]
  %v113 = vld [vmem:[%s3 + $0x70] sm:$0xff]
  %v114 = vld [vmem:[%s3 + $0x78] sm:$0xff]
  %v115 = vld [vmem:[%s4] sm:$0x3]
  %v117 = vlaneseq
  %v118 = vshrl.u32 %v117, 7
  %v119 = vsub.s32 0, %v118
  %v120 = vrot.slane %v115, %v119
  %v121 = vlaneseq
  %v122 = vshrl.u32 %v121, 7
  %v123 = vsub.s32 1, %v122
  %v124 = vrot.slane %v115, %v123
  %v143 = vunpack.c.l.b16 %v99
  %v144 = vunpack.c.h.b16 %v99
  %v145 = vunpack.c.l.b16 %v100
  %v146 = vunpack.c.h.b16 %v100
  %v147 = vunpack.c.l.b16 %v101
  %v148 = vunpack.c.h.b16 %v101
  %v149 = vunpack.c.l.b16 %v102
  %v150 = vunpack.c.h.b16 %v102
  %v151 = vunpack.c.l.b16 %v103
  %v152 = vunpack.c.h.b16 %v103
  %v153 = vunpack.c.l.b16 %v104
  %v154 = vunpack.c.h.b16 %v104
  %v155 = vunpack.c.l.b16 %v105
  %v156 = vunpack.c.h.b16 %v105
  %v157 = vunpack.c.l.b16 %v106
  %v158 = vunpack.c.h.b16 %v106
  %v159 = vunpack.c.l.b16 %v107
  %v160 = vunpack.c.h.b16 %v107
  %v161 = vunpack.c.l.b16 %v108
  %v162 = vunpack.c.h.b16 %v108
  %v163 = vunpack.c.l.b16 %v109
  %v164 = vunpack.c.h.b16 %v109
  %v165 = vunpack.c.l.b16 %v110
  %v166 = vunpack.c.h.b16 %v110
  %v167 = vunpack.c.l.b16 %v111
  %v168 = vunpack.c.h.b16 %v111
  %v169 = vunpack.c.l.b16 %v112
  %v170 = vunpack.c.h.b16 %v112
  %v171 = vunpack.c.l.b16 %v113
  %v172 = vunpack.c.h.b16 %v113
  %v173 = vunpack.c.l.b16 %v114
  %v174 = vunpack.c.h.b16 %v114
  %v175 = vpack.c.b16 %v145, %v143
  %v176 = vpack.c.b16 %v146, %v144
  %v177 = vpack.c.b16 %v149, %v147
  %v178 = vpack.c.b16 %v150, %v148
  %v179 = vpack.c.b16 %v153, %v151
  %v180 = vpack.c.b16 %v154, %v152
  %v181 = vpack.c.b16 %v157, %v155
  %v182 = vpack.c.b16 %v158, %v156
  %v183 = vpack.c.b16 %v161, %v159
  %v184 = vpack.c.b16 %v162, %v160
  %v185 = vpack.c.b16 %v165, %v163
  %v186 = vpack.c.b16 %v166, %v164
  %v187 = vpack.c.b16 %v169, %v167
  %v188 = vpack.c.b16 %v170, %v168
  %v189 = vpack.c.b16 %v173, %v171
  %v190 = vpack.c.b16 %v174, %v172
  %207 = vmatprep.subr.bf16.mxu0 %v176
  %208 = vmatpush1.bf16.msra.mxu0 %v175
  %209 = vmatprep.subr.bf16.mxu0 %v178
  %210 = vmatpush1.bf16.msra.mxu0 %v177
  %211 = vmatprep.subr.bf16.mxu0 %v180
  %212 = vmatpush1.bf16.msra.mxu0 %v179
  %213 = vmatprep.subr.bf16.mxu0 %v182
  %214 = vmatpush1.bf16.msra.mxu0 %v181
  %215 = vmatprep.subr.bf16.mxu0 %v184
  %216 = vmatpush1.bf16.msra.mxu0 %v183
  %217 = vmatprep.subr.bf16.mxu0 %v186
  %218 = vmatpush1.bf16.msra.mxu0 %v185
  %219 = vmatprep.subr.bf16.mxu0 %v188
  %220 = vmatpush1.bf16.msra.mxu0 %v187
  %221 = vmatprep.subr.bf16.mxu0 %v190
  %222 = vmatpush1.bf16.msra.mxu0 %v189
  %223 = vmatprep.subr.bf16.mxu0 0
  %224 = vmatpush1.bf16.msra.mxu0 0
  %225 = vmatprep.subr.bf16.mxu0 0
  %226 = vmatpush1.bf16.msra.mxu0 0
  %227 = vmatprep.subr.bf16.mxu0 0
  %228 = vmatpush1.bf16.msra.mxu0 0
  %229 = vmatprep.subr.bf16.mxu0 0
  %230 = vmatpush1.bf16.msra.mxu0 0
  %231 = vmatprep.subr.bf16.mxu0 0
  %232 = vmatpush1.bf16.msra.mxu0 0
  %233 = vmatprep.subr.bf16.mxu0 0
  %234 = vmatpush1.bf16.msra.mxu0 0
  %235 = vmatprep.subr.bf16.mxu0 0
  %236 = vmatpush1.bf16.msra.mxu0 0
  %237 = vmatprep.subr.bf16.mxu0 0
  %238 = vmatpush1.bf16.msra.mxu0 0
  %239 = vmatprep.mubr.bf16.mxu0 0
  %240 = vmatmul.mubr.bf16.gmra.mrb[0].mxu0 %v98
  %v241 = vpop.f32.mrb[0].mxu0
  %v242 = vadd.f32 %v120, %v241
  %v243 = vpop.f32.mrb[0].mxu0
  %v244 = vadd.f32 %v124, %v243
  %v245 = vpop.f32.mrb[0].mxu0
  %v246 = vadd.f32 %v120, %v245
  %v247 = vpop.f32.mrb[0].mxu0
  %v248 = vadd.f32 %v124, %v247
  %249 = vdwg.mxu0
  %v250 = vmax.f32 %v242, 0.0
  %v251 = vmax.f32 %v244, 0.0
  %v252 = vmax.f32 %v246, 0.0
  %v253 = vmax.f32 %v248, 0.0
  %v254 = vpack.c.bf16 %v252, %v250
  %v255 = vpack.c.bf16 %v253, %v251
  %v256 = vld [vmem:[%s5] sm:$0xf]
  %v257 = vld [vmem:[%s5 + $0x4] sm:$0xf]
  %v258 = vld [vmem:[%s5 + $0x8] sm:$0xf]
  %v259 = vld [vmem:[%s5 + $0xc] sm:$0xf]
  %v260 = vld [vmem:[%s5 + $0x10] sm:$0xf]
  %v261 = vld [vmem:[%s5 + $0x14] sm:$0xf]
  %v262 = vld [vmem:[%s5 + $0x18] sm:$0xf]
  %v263 = vld [vmem:[%s5 + $0x1c] sm:$0xf]
  %v264 = vld [vmem:[%s5 + $0x20] sm:$0xf]
  %v265 = vld [vmem:[%s5 + $0x24] sm:$0xf]
  %v266 = vld [vmem:[%s5 + $0x28] sm:$0xf]
  %v267 = vld [vmem:[%s5 + $0x2c] sm:$0xf]
  %v268 = vld [vmem:[%s5 + $0x30] sm:$0xf]
  %v269 = vld [vmem:[%s5 + $0x34] sm:$0xf]
  %v270 = vld [vmem:[%s5 + $0x38] sm:$0xf]
  %v271 = vld [vmem:[%s5 + $0x3c] sm:$0xf]
  %v272 = vld [vmem:[%s5 + $0x40] sm:$0xf]
  %v273 = vld [vmem:[%s5 + $0x44] sm:$0xf]
  %v274 = vld [vmem:[%s5 + $0x48] sm:$0xf]
  %v275 = vld [vmem:[%s5 + $0x4c] sm:$0xf]
  %v276 = vld [vmem:[%s5 + $0x50] sm:$0xf]
  %v277 = vld [vmem:[%s5 + $0x54] sm:$0xf]
  %v278 = vld [vmem:[%s5 + $0x58] sm:$0xf]
  %v279 = vld [vmem:[%s5 + $0x5c] sm:$0xf]
  %v280 = vld [vmem:[%s5 + $0x60] sm:$0xf]
  %v281 = vld [vmem:[%s5 + $0x64] sm:$0xf]
  %v282 = vld [vmem:[%s5 + $0x68] sm:$0xf]
  %v283 = vld [vmem:[%s5 + $0x6c] sm:$0xf]
  %v284 = vld [vmem:[%s5 + $0x70] sm:$0xf]
  %v285 = vld [vmem:[%s5 + $0x74] sm:$0xf]
  %v286 = vld [vmem:[%s5 + $0x78] sm:$0xf]
  %v287 = vld [vmem:[%s5 + $0x7c] sm:$0xf]
  %v288 = vld [vmem:[%s6] sm:$0x1]
  %v290 = vlaneseq
  %v291 = vshrl.u32 %v290, 7
  %v292 = vsub.s32 0, %v291
  %v293 = vrot.slane %v288, %v292
  %v327 = vunpack.c.l.b16 %v256
  %v328 = vunpack.c.l.b16 %v257
  %v329 = vunpack.c.l.b16 %v258
  %v330 = vunpack.c.l.b16 %v259
  %v331 = vunpack.c.l.b16 %v260
  %v332 = vunpack.c.l.b16 %v261
  %v333 = vunpack.c.l.b16 %v262
  %v334 = vunpack.c.l.b16 %v263
  %v335 = vunpack.c.l.b16 %v264
  %v336 = vunpack.c.l.b16 %v265
  %v337 = vunpack.c.l.b16 %v266
  %v338 = vunpack.c.l.b16 %v267
  %v339 = vunpack.c.l.b16 %v268
  %v340 = vunpack.c.l.b16 %v269
  %v341 = vunpack.c.l.b16 %v270
  %v342 = vunpack.c.l.b16 %v271
  %v343 = vunpack.c.l.b16 %v272
  %v344 = vunpack.c.l.b16 %v273
  %v345 = vunpack.c.l.b16 %v274
  %v346 = vunpack.c.l.b16 %v275
  %v347 = vunpack.c.l.b16 %v276
  %v348 = vunpack.c.l.b16 %v277
  %v349 = vunpack.c.l.b16 %v278
  %v350 = vunpack.c.l.b16 %v279
  %v351 = vunpack.c.l.b16 %v280
  %v352 = vunpack.c.l.b16 %v281
  %v353 = vunpack.c.l.b16 %v282
  %v354 = vunpack.c.l.b16 %v283
  %v355 = vunpack.c.l.b16 %v284
  %v356 = vunpack.c.l.b16 %v285
  %v357 = vunpack.c.l.b16 %v286
  %v358 = vunpack.c.l.b16 %v287
  %v359 = vpack.c.b16 %v328, %v327
  %v360 = vpack.c.b16 %v330, %v329
  %v361 = vpack.c.b16 %v332, %v331
  %v362 = vpack.c.b16 %v334, %v333
  %v363 = vpack.c.b16 %v336, %v335
  %v364 = vpack.c.b16 %v338, %v337
  %v365 = vpack.c.b16 %v340, %v339
  %v366 = vpack.c.b16 %v342, %v341
  %v367 = vpack.c.b16 %v344, %v343
  %v368 = vpack.c.b16 %v346, %v345
  %v369 = vpack.c.b16 %v348, %v347
  %v370 = vpack.c.b16 %v350, %v349
  %v371 = vpack.c.b16 %v352, %v351
  %v372 = vpack.c.b16 %v354, %v353
  %v373 = vpack.c.b16 %v356, %v355
  %v374 = vpack.c.b16 %v358, %v357
  %391 = vmatprep.subr.bf16.mxu0 0
  %392 = vmatpush1.bf16.msra.mxu0 %v359
  %393 = vmatprep.subr.bf16.mxu0 0
  %394 = vmatpush1.bf16.msra.mxu0 %v360
  %395 = vmatprep.subr.bf16.mxu0 0
  %396 = vmatpush1.bf16.msra.mxu0 %v361
  %397 = vmatprep.subr.bf16.mxu0 0
  %398 = vmatpush1.bf16.msra.mxu0 %v362
  %399 = vmatprep.subr.bf16.mxu0 0
  %400 = vmatpush1.bf16.msra.mxu0 %v363
  %401 = vmatprep.subr.bf16.mxu0 0
  %402 = vmatpush1.bf16.msra.mxu0 %v364
  %403 = vmatprep.subr.bf16.mxu0 0
  %404 = vmatpush1.bf16.msra.mxu0 %v365
  %405 = vmatprep.subr.bf16.mxu0 0
  %406 = vmatpush1.bf16.msra.mxu0 %v366
  %407 = vmatprep.subr.bf16.mxu0 0
  %408 = vmatpush1.bf16.msra.mxu0 %v367
  %409 = vmatprep.subr.bf16.mxu0 0
  %410 = vmatpush1.bf16.msra.mxu0 %v368
  %411 = vmatprep.subr.bf16.mxu0 0
  %412 = vmatpush1.bf16.msra.mxu0 %v369
  %413 = vmatprep.subr.bf16.mxu0 0
  %414 = vmatpush1.bf16.msra.mxu0 %v370
  %415 = vmatprep.subr.bf16.mxu0 0
  %416 = vmatpush1.bf16.msra.mxu0 %v371
  %417 = vmatprep.subr.bf16.mxu0 0
  %418 = vmatpush1.bf16.msra.mxu0 %v372
  %419 = vmatprep.subr.bf16.mxu0 0
  %420 = vmatpush1.bf16.msra.mxu0 %v373
  %421 = vmatprep.subr.bf16.mxu0 0
  %422 = vmatpush1.bf16.msra.mxu0 %v374
  %423 = vmatprep.mubr.bf16.mxu0 %v255
  %424 = vmatmul.mubr.bf16.gmra.mrb[0].mxu0 %v254
  %v425 = vpop.f32.mrb[0].mxu0
  %v426 = vadd.f32 %v293, %v425
  %v427 = vpop.f32.mrb[0].mxu0
  %v428 = vpop.f32.mrb[0].mxu0
  %v429 = vadd.f32 %v293, %v428
  %v430 = vpop.f32.mrb[0].mxu0
  %431 = vdwg.mxu0
  %v432 = vlaneseq
  %v433 = vand.u32 %v432, 127
  %vm434 = vcmp.lt.s32.totalorder %v433, 4
  %v435 = vsel %vm434, %v426, -1e+30
  %v436 = vsel %vm434, %v429, -1e+30
  %437 = vmax.xlane.f32.xlu0 %v435
  %v438 = vpop.xlane.xlu0 %437
  %439 = vmax.xlane.f32.xlu0 %v436
  %v440 = vpop.xlane.xlu0 %439
  %v441 = vsub.f32 %v435, %v438
  %v442 = vsub.f32 %v436, %v440
  %v443 = vmul.f32 %v441, 1.442695
  %v444 = vpow.pop %v443
  %v445 = vmul.f32 %v442, 1.442695
  %v446 = vpow.pop %v445
  %447 = vadd.xlane.f32.xlu0 %v444
  %v448 = vpop.xlane.xlu0 %447
  %449 = vadd.xlane.f32.xlu0 %v446
  %v450 = vpop.xlane.xlu0 %449
  %v451 = vrcp.pop %v448
  %v452 = vmul.f32 %v444, %v451
  %v453 = vrcp.pop %v450
  %v454 = vmul.f32 %v446, %v453
  %v455 = vpack.c.bf16 %v454, %v452
  %v457 = vunpack.c.l.b16 %v455
  %v458 = vunpack.c.h.b16 %v455
  %v459 = vpack.c.b16 %v457, %v457
  %v460 = vpack.c.b16 %v458, %v458
  %463 = vst [vmem:[%s7] sm:$0xf] %v459
  %464 = vst [vmem:[%s7 + $0x4] sm:$0xf] %v460
  %467 = vrot.lane.b32.xlu0 %v426, 124
  %v468 = vpop.permute.xlu0 %467
  %469 = vrot.lane.b32.xlu0 %v429, 124
  %v470 = vpop.permute.xlu0 %469
  %vm473 = vcmask 7168
  %474 = vst.msk [vmem:[%s8] sm:$0xff] %vm473, %v468
  %475 = vst.msk [vmem:[%s8 + $0x8] sm:$0xff] %vm473, %v470
  // Predicated region
  $region30: #{_lambda_.1} parent=0 // pred_check
    _
  $region31: #{_lambda_.1} parent=0 // pred_check_branch
    %477 = sbr.rel (0) target = $region33
  $region32: #{_lambda_.1} parent=0 // pred_region
    _
  $region33: #{_lambda_.1} parent=0 // pred_fallthru
    _
  // Predicated region
  $region34: #{_lambda_.1} parent=0 // pred_check
    _
  $region35: #{_lambda_.1} parent=0 // pred_check_branch
    %479 = sbr.rel (0) target = $region37
  $region36: #{_lambda_.1} parent=0 // pred_region
    _
  $region37: #{_lambda_.1} parent=0 // pred_fallthru
    _
  // Predicated region
  $region38: #{_lambda_.1} parent=0 // pred_check
    _
  $region39: #{_lambda_.1} parent=0 // pred_check_branch
    %481 = sbr.rel (0) target = $region41
  $region40: #{_lambda_.1} parent=0 // pred_region
    _
  $region41: #{_lambda_.1} parent=0 // pred_fallthru
    _
  // Predicated region
  $region42: #{_lambda_.1} parent=0 // pred_check
    _
  $region43: #{_lambda_.1} parent=0 // pred_check_branch
    %483 = sbr.rel (0) target = $region45
  $region44: #{_lambda_.1} parent=0 // pred_region
    _
  $region45: #{_lambda_.1} parent=0 // pred_fallthru
    _

</llo_original>
